<compile_context>
chip_gen: v6e
topology: v6e:2x2x1
jax: 0.10.0
libtpu: 0.0.40
codegen_flags: <defaults>
</compile_context>

<pallas_src>
import functools

import jax
import jax.numpy as jnp
from jax.experimental import pallas as pl
from jax.experimental.pallas import tpu as pltpu


def _round_up(x, m):
    return ((x + m - 1) // m) * m


def _round_down(x, m):
    return (x // m) * m


def _pcl_cld_branch_kernel(cen_ref, feat_ref, lab_ref, out_ref, *, batch_size):
    """One batch tile of one branch.

    cen_ref  : (C, D)  bf16 centroids pre-scaled by 1/phi (resident, 1-buffered)
    feat_ref : (tb, D) features of the paired view (input dtype)
    lab_ref  : (1, tb) int32 labels
    out_ref  : (1, tb) f32 per-sample log(pos) - logsumexp (0 on padded columns)
    """
    # (C, tb) = scaled_centroids @ features^T, contracting D of both operands
    # (no in-kernel transpose). bf16 x bf16 -> native MXU path, f32 accumulate.
    logits = jax.lax.dot_general(
        cen_ref[...],
        feat_ref[...].astype(jnp.bfloat16),
        dimension_numbers=(((1,), (1,)), ((), ())),
        preferred_element_type=jnp.float32,
    )
    c, tb = logits.shape

    # Stable log-softmax over the cluster (sublane) axis; only the shifted
    # logits stay live.
    col_max = jnp.max(logits, axis=0, keepdims=True)               # (1, tb)
    shifted = logits - col_max                                      # (C, tb)
    sum_exp = jnp.sum(jnp.exp(shifted), axis=0, keepdims=True)      # (1, tb)

    # positive-pair (shifted) logit via one-hot select on the label row.
    row_ids = jax.lax.broadcasted_iota(jnp.int32, (c, tb), 0)
    onehot = row_ids == lab_ref[...]
    pos_shifted = jnp.sum(jnp.where(onehot, shifted, 0.0), axis=0, keepdims=True)

    # Zero out padded / out-of-range batch columns (ragged last tile, small-B pad).
    col_ids = pl.program_id(0) * tb + jax.lax.broadcasted_iota(jnp.int32, (1, tb), 1)
    valid = col_ids < batch_size
    out_ref[...] = jnp.where(valid, pos_shifted - jnp.log(sum_exp), 0.0)


def _vmem_bytes(C, D, tb, feat_itemsize):
    # single-buffered bf16 centroids + double-buffered feature tile +
    # label/output blocks + ~8 live (C, tb) f32/int32 temporaries.
    return (C * D * 2
            + 2 * tb * D * feat_itemsize
            + 4 * (2 * tb * 4)
            + 8 * C * tb * 4)


def _branch_log_ratios(cen_scaled, feats, labels2d, *, B, tb, nb, vmem_limit):
    C, D = cen_scaled.shape
    Bp = feats.shape[0]
    its = jnp.dtype(feats.dtype).itemsize
    cost = pl.CostEstimate(
        flops=int(2 * C * Bp * D),
        transcendentals=int(C * Bp + Bp),
        bytes_accessed=int(Bp * D * its + C * D * 2 + Bp * 4 + Bp * 4),
    )
    return pl.pallas_call(
        functools.partial(_pcl_cld_branch_kernel, batch_size=B),
        out_shape=jax.ShapeDtypeStruct((1, Bp), jnp.float32),
        grid=(nb,),
        in_specs=[
            # centroids: constant block index -> resident; single-buffered.
            pl.BlockSpec((C, D), lambda i: (0, 0), pipeline_mode=pl.Buffered(1)),
            pl.BlockSpec((tb, D), lambda i: (i, 0)),      # feature tile
            pl.BlockSpec((1, tb), lambda i: (0, i)),      # labels tile
        ],
        out_specs=pl.BlockSpec((1, tb), lambda i: (0, i)),
        compiler_params=pltpu.CompilerParams(
            dimension_semantics=("parallel",),
            vmem_limit_bytes=int(vmem_limit),
        ),
        cost_estimate=cost,
    )(cen_scaled, feats, labels2d)


@functools.partial(jax.jit, static_argnames="block_b")
def pcl_cld_loss_2(features, features_I, M_kmeans, M_kmeans_I,
                   concentrations, concentrations_I, labels, labels_I, lb,
                   *, block_b=1024):
    """Forward pass of PclCldLoss_2 (returns a scalar)."""
    B, D = features.shape
    C = concentrations.shape[0]

    # Fold 1/phi into the centroid rows (tiny (C, D) op, done once per branch)
    # and cast to bf16 for the native MXU path.
    inv_c = (1.0 / concentrations.astype(jnp.float32))[:, None]
    inv_c_I = (1.0 / concentrations_I.astype(jnp.float32))[:, None]
    cen = (M_kmeans.astype(jnp.float32) * inv_c).astype(jnp.bfloat16)
    cen_I = (M_kmeans_I.astype(jnp.float32) * inv_c_I).astype(jnp.bfloat16)

    labels = labels.astype(jnp.int32)
    labels_I = labels_I.astype(jnp.int32)

    # --- batch tiling (no feature copies when B >= 128) ----------------------
    if B < 128:
        # tiny batch: pad to one lane-dense 128-wide tile (negligible copy).
        Bp = 128
        pad = Bp - B
        feats_or = jnp.pad(features_I, ((0, pad), (0, 0)))
        feats_au = jnp.pad(features, ((0, pad), (0, 0)))
        lab_or = jnp.pad(labels, (0, pad)).reshape(1, Bp)
        lab_au = jnp.pad(labels_I, (0, pad)).reshape(1, Bp)
        tb = 128
    else:
        Bp = B
        feats_or, feats_au = features_I, features
        lab_or = labels.reshape(1, B)
        lab_au = labels_I.reshape(1, B)
        tb = min(max(128, _round_down(block_b, 128)), _round_down(B, 128))

    # --- VMEM-aware tile shrink + limit --------------------------------------
    its = jnp.dtype(features.dtype).itemsize
    try:
        vmem_cap = int(getattr(pltpu.get_tpu_info(), "vmem_capacity_bytes",
                               64 << 20))
    except Exception:
        vmem_cap = 64 << 20                      # conservative (v7x per-TC)
    budget = (3 * vmem_cap) // 4                 # headroom for Mosaic scratch
    while tb > 128 and _vmem_bytes(C, D, tb, its) > budget:
        tb = max(128, _round_down(tb // 2, 128))
    nb = pl.cdiv(Bp, tb)
    est = _vmem_bytes(C, D, tb, its)
    vmem_limit = max(min(max(2 * est, 4 << 20), budget), est)

    # branch 0: M_kmeans (.) features_I^T, labels ; branch 1: M_kmeans_I (.) features^T, labels_I
    lr_or = _branch_log_ratios(cen, feats_or, lab_or,
                               B=B, tb=tb, nb=nb, vmem_limit=vmem_limit)
    lr_au = _branch_log_ratios(cen_I, feats_au, lab_au,
                               B=B, tb=tb, nb=nb, vmem_limit=vmem_limit)

    total = jnp.sum(lr_or) + jnp.sum(lr_au)
    lb = jnp.asarray(lb, jnp.float32)
    return (1.0 / B) * (-lb) * 0.5 * total


def _reference(features, features_I, M_kmeans, M_kmeans_I,
               concentrations, concentrations_I, labels, labels_I, lb):
    # Direct transcription of the PyTorch module (exp/divide/log form).
    B = features.shape[0]
    inv_c = (1.0 / concentrations)[:, None]
    inv_c_I = (1.0 / concentrations_I)[:, None]
    exp_l = jnp.exp((M_kmeans @ features_I.T) * inv_c)
    exp_lI = jnp.exp((M_kmeans_I @ features.T) * inv_c_I)
    log_sum = jnp.sum(exp_l, axis=0)
    log_sum_I = jnp.sum(exp_lI, axis=0)
    pos = exp_l[labels, jnp.arange(B)]
    pos_I = exp_lI[labels_I, jnp.arange(B)]
    m = jnp.sum(jnp.log(pos / log_sum))
    m_I = jnp.sum(jnp.log(pos_I / log_sum_I))
    return (1.0 / B) * (-lb) * 0.5 * (m + m_I)


if __name__ == "__main__":
    def _make_inputs(seed, B, D, C):
        ks = jax.random.split(jax.random.PRNGKey(seed), 8)
        features = jax.random.normal(ks[0], (B, D), dtype=jnp.float32)
        features_I = jax.random.normal(ks[1], (B, D), dtype=jnp.float32)
        M_kmeans = jax.random.normal(ks[2], (C, D), dtype=jnp.float32)
        M_kmeans_I = jax.random.normal(ks[3], (C, D), dtype=jnp.float32)
        conc = jax.random.uniform(ks[4], (C,), dtype=jnp.float32,
                                  minval=5.0, maxval=10.0)
        conc_I = jax.random.uniform(ks[5], (C,), dtype=jnp.float32,
                                    minval=5.0, maxval=10.0)
        labels = jax.random.randint(ks[6], (B,), 0, C, dtype=jnp.int32)
        labels_I = jax.random.randint(ks[7], (B,), 0, C, dtype=jnp.int32)
        return (features, features_I, M_kmeans, M_kmeans_I,
                conc, conc_I, labels, labels_I)

    lb = 0.7

    # Case 1: tiny batch (B=8 < 128): single lane-dense padded tile.
    args = _make_inputs(0, B=8, D=32, C=8)
    loss = jax.block_until_ready(pcl_cld_loss_2(*args, lb))
    ref = _reference(*args, lb)
    assert jnp.allclose(loss, ref, rtol=2e-2, atol=2e-2), (loss, ref)

    # Case 2: multi-step grid with a ragged last tile (B=200, tb=128, nb=2).
    args = _make_inputs(1, B=200, D=32, C=8)
    loss = jax.block_until_ready(pcl_cld_loss_2(*args, lb, block_b=128))
    ref = _reference(*args, lb)
    assert jnp.allclose(loss, ref, rtol=2e-2, atol=2e-2), (loss, ref)

    # Case 3: default tiling path (B=300 -> tb=256, nb=2, ragged last tile).
    args = _make_inputs(2, B=300, D=64, C=32)
    loss = jax.block_until_ready(pcl_cld_loss_2(*args, lb))
    ref = _reference(*args, lb)
    assert jnp.allclose(loss, ref, rtol=2e-2, atol=2e-2), (loss, ref)

    print("KERNEL_OK")
</pallas_src>

<mosaic_0001>
module attributes {stable_mosaic.version = 11 : i64} {
  func.func @_pcl_cld_branch_kernel(%arg0: i32, %arg1: memref<8x32xbf16, #tpu.memory_space<vmem>>, %arg2: memref<128x32xf32, #tpu.memory_space<vmem>>, %arg3: memref<1x128xi32, #tpu.memory_space<vmem>>, %arg4: memref<1x128xf32, #tpu.memory_space<vmem>>) attributes {dimension_semantics = [#tpu.dimension_semantics<parallel>], iteration_bounds = array<i64: 1>, scalar_prefetch = 0 : i64, scratch_operands = 0 : i64, tpu.core_type = #tpu.core_type<tc>, window_params = [{pipeline_mode = #tpu.pipeline_mode<synchronous>, transform_indices = @transform_0, window_bounds = array<i64: 8, 32>}, {transform_indices = @transform_1, window_bounds = array<i64: 128, 32>}, {transform_indices = @transform_2, window_bounds = array<i64: 1, 128>}, {transform_indices = @transform_3, window_bounds = array<i64: 1, 128>}]} {
    %c0 = arith.constant 0 : index
    %c0_0 = arith.constant 0 : index
    %0 = vector.load %arg1[%c0, %c0_0] : memref<8x32xbf16, #tpu.memory_space<vmem>>, vector<8x32xbf16>
    %c0_1 = arith.constant 0 : index
    %c0_2 = arith.constant 0 : index
    %1 = vector.load %arg2[%c0_1, %c0_2] : memref<128x32xf32, #tpu.memory_space<vmem>>, vector<128x32xf32>
    %2 = arith.truncf %1 : vector<128x32xf32> to vector<128x32xbf16>
    %cst = arith.constant dense<0.000000e+00> : vector<8x128xf32>
    %3 = tpu.matmul %0, %2, %cst {dimension_numbers = #tpu.dot_dimension_numbers<[1], [1], [0], [0], [0, 0, 1, 0], [], []>} : vector<8x32xbf16>, vector<128x32xbf16>, vector<8x128xf32> -> vector<8x128xf32>
    %cst_3 = arith.constant dense<0xFF800000> : vector<128xf32>
    %4 = vector.multi_reduction <maximumf>, %3, %cst_3 [0] : vector<8x128xf32> to vector<128xf32>
    %5 = vector.shape_cast %4 : vector<128xf32> to vector<1x128xf32>
    %6 = vector.broadcast %5 : vector<1x128xf32> to vector<8x128xf32>
    %7 = arith.subf %3, %6 : vector<8x128xf32>
    %8 = math.exp %7 : vector<8x128xf32>
    %cst_4 = arith.constant dense<0.000000e+00> : vector<128xf32>
    %9 = vector.multi_reduction <add>, %8, %cst_4 [0] : vector<8x128xf32> to vector<128xf32>
    %10 = vector.shape_cast %9 : vector<128xf32> to vector<1x128xf32>
    %11 = tpu.iota {dimensions = array<i32: 0>} : vector<8x128xi32>
    %c0_5 = arith.constant 0 : index
    %c0_6 = arith.constant 0 : index
    %12 = vector.load %arg3[%c0_5, %c0_6] : memref<1x128xi32, #tpu.memory_space<vmem>>, vector<1x128xi32>
    %13 = vector.broadcast %12 : vector<1x128xi32> to vector<8x128xi32>
    %14 = arith.cmpi eq, %11, %13 : vector<8x128xi32>
    %cst_7 = arith.constant 0.000000e+00 : f32
    %15 = vector.broadcast %cst_7 : f32 to vector<8x128xf32>
    %16 = arith.select %14, %7, %15 : vector<8x128xi1>, vector<8x128xf32>
    %cst_8 = arith.constant dense<0.000000e+00> : vector<128xf32>
    %17 = vector.multi_reduction <add>, %16, %cst_8 [0] : vector<8x128xf32> to vector<128xf32>
    %18 = vector.shape_cast %17 : vector<128xf32> to vector<1x128xf32>
    %c128_i32 = arith.constant 128 : i32
    %19 = arith.muli %arg0, %c128_i32 : i32
    %20 = tpu.iota {dimensions = array<i32: 1>} : vector<1x128xi32>
    %21 = vector.broadcast %19 : i32 to vector<1x128xi32>
    %22 = arith.addi %21, %20 : vector<1x128xi32>
    %c8_i32 = arith.constant 8 : i32
    %23 = vector.broadcast %c8_i32 : i32 to vector<1x128xi32>
    %24 = arith.cmpi slt, %22, %23 : vector<1x128xi32>
    %25 = math.log %10 : vector<1x128xf32>
    %26 = arith.subf %18, %25 : vector<1x128xf32>
    %cst_9 = arith.constant 0.000000e+00 : f32
    %27 = vector.broadcast %cst_9 : f32 to vector<1x128xf32>
    %28 = arith.select %24, %26, %27 : vector<1x128xi1>, vector<1x128xf32>
    %c0_10 = arith.constant 0 : index
    %c0_11 = arith.constant 0 : index
    %29 = vector.load %arg4[%c0_10, %c0_11] : memref<1x128xf32, #tpu.memory_space<vmem>>, vector<1x128xf32>
    tpu.vector_store %arg4[%c0_10, %c0_11], %28 {strides = array<i32>} : memref<1x128xf32, #tpu.memory_space<vmem>>, vector<1x128xf32>,
    return
  }
  func.func @transform_0(%arg0: i32) -> (i32, i32) {
    %c0_i32 = arith.constant 0 : i32
    %c0_i32_0 = arith.constant 0 : i32
    %c0_i32_1 = arith.constant 0 : i32
    return %c0_i32, %c0_i32_0 : i32, i32
  }
  func.func @transform_1(%arg0: i32) -> (i32, i32) {
    %c0_i32 = arith.constant 0 : i32
    %c0_i32_0 = arith.constant 0 : i32
    return %arg0, %c0_i32 : i32, i32
  }
  func.func @transform_2(%arg0: i32) -> (i32, i32) {
    %c0_i32 = arith.constant 0 : i32
    %c0_i32_0 = arith.constant 0 : i32
    return %c0_i32, %arg0 : i32, i32
  }
  func.func @transform_3(%arg0: i32) -> (i32, i32) {
    %c0_i32 = arith.constant 0 : i32
    %c0_i32_0 = arith.constant 0 : i32
    return %c0_i32, %arg0 : i32, i32
  }
}

</mosaic_0001>

<llo_original>
// kernel: pcl_cld_loss_2.2
$region0: #{pcl_cld_loss_2.2}
  #allocation0 [shape = 'u32[]', space=smem, size = 0x4, offset = 0x4, fixed_abs, tag = 'smem constant byte address 0x4 - core index']
  #allocation1 [shape = 'u32[144,128]{1,0:T(1,128)}', space=vmem, size = 0x12000, scoped, tag = 'internal scratch']
  %s0 = inlined_call_operand.vmem [shape: bf16[8,32], index: 0, kind: input, shape index: {}]
  %s1 = inlined_call_operand.vmem [shape: f32[128,32], index: 1, kind: input, shape index: {}]
  %s2 = inlined_call_operand.vmem [shape: s32[1,128], index: 2, kind: input, shape index: {}]
  %s3 = inlined_call_operand.vmem [shape: f32[1,128], index: 3, kind: output, shape index: {}]
  %s4 = sld [smem:[#allocation0]]
  $region22: #{pcl_cld_loss_2.2} parent=0
    _
  %s6 = ssub.s32 1, %s4
  %s7 = scalar_select 0, %s6, %s4
  // Predicated region
  $region2: #{pcl_cld_loss_2.2} parent=0 // pred_check
    _
  $region3: #{pcl_cld_loss_2.2} parent=0 // pred_check_branch
    %9 = sbr.rel (0) target = $region5
  $region4: #{pcl_cld_loss_2.2} parent=0 // pred_region
    _
  $region5: #{pcl_cld_loss_2.2} parent=0 // pred_fallthru
    _
  // Predicated region
  $region6: #{pcl_cld_loss_2.2} parent=0 // pred_check
    _
  $region7: #{pcl_cld_loss_2.2} parent=0 // pred_check_branch
    %11 = sbr.rel (0) target = $region9
  $region8: #{pcl_cld_loss_2.2} parent=0 // pred_region
    _
  $region9: #{pcl_cld_loss_2.2} parent=0 // pred_fallthru
    _
  // Predicated region
  $region10: #{pcl_cld_loss_2.2} parent=0 // pred_check
    _
  $region11: #{pcl_cld_loss_2.2} parent=0 // pred_check_branch
    %13 = sbr.rel (0) target = $region13
  $region12: #{pcl_cld_loss_2.2} parent=0 // pred_region
    _
  $region13: #{pcl_cld_loss_2.2} parent=0 // pred_fallthru
    _
  %v15 = vld [vmem:[%s0] sm:$0xf]
  %v16 = vld [vmem:[%s1] sm:$0xff]
  %v17 = vld [vmem:[%s1 + $0x8] sm:$0xff]
  %v18 = vld [vmem:[%s1 + $0x10] sm:$0xff]
  %v19 = vld [vmem:[%s1 + $0x18] sm:$0xff]
  %v20 = vld [vmem:[%s1 + $0x20] sm:$0xff]
  %v21 = vld [vmem:[%s1 + $0x28] sm:$0xff]
  %v22 = vld [vmem:[%s1 + $0x30] sm:$0xff]
  %v23 = vld [vmem:[%s1 + $0x38] sm:$0xff]
  %v24 = vld [vmem:[%s1 + $0x40] sm:$0xff]
  %v25 = vld [vmem:[%s1 + $0x48] sm:$0xff]
  %v26 = vld [vmem:[%s1 + $0x50] sm:$0xff]
  %v27 = vld [vmem:[%s1 + $0x58] sm:$0xff]
  %v28 = vld [vmem:[%s1 + $0x60] sm:$0xff]
  %v29 = vld [vmem:[%s1 + $0x68] sm:$0xff]
  %v30 = vld [vmem:[%s1 + $0x70] sm:$0xff]
  %v31 = vld [vmem:[%s1 + $0x78] sm:$0xff]
  %v32 = vpack.c.bf16 %v17, %v16
  %v33 = vpack.c.bf16 %v19, %v18
  %v34 = vpack.c.bf16 %v21, %v20
  %v35 = vpack.c.bf16 %v23, %v22
  %v36 = vpack.c.bf16 %v25, %v24
  %v37 = vpack.c.bf16 %v27, %v26
  %v38 = vpack.c.bf16 %v29, %v28
  %v39 = vpack.c.bf16 %v31, %v30
  %vm40 = vcmask 261120
  %v42 = vsel %vm40, %v15, 0
  %v45 = vsel %vm40, %v32, 0
  %v48 = vsel %vm40, %v33, 0
  %v51 = vsel %vm40, %v34, 0
  %v54 = vsel %vm40, %v35, 0
  %v57 = vsel %vm40, %v36, 0
  %v60 = vsel %vm40, %v37, 0
  %v63 = vsel %vm40, %v38, 0
  %v66 = vsel %vm40, %v39, 0
  %68 = vmatprep.subr.bf16.mxu0 0
  %69 = vmatpush1.bf16.xpose.msra.mxu0 %v66
  %70 = vmatprep.subr.bf16.mxu0 0
  %71 = vmatpush1.bf16.xpose.msra.mxu0 %v63
  %72 = vmatprep.subr.bf16.mxu0 0
  %73 = vmatpush1.bf16.xpose.msra.mxu0 %v60
  %74 = vmatprep.subr.bf16.mxu0 0
  %75 = vmatpush1.bf16.xpose.msra.mxu0 %v57
  %76 = vmatprep.subr.bf16.mxu0 0
  %77 = vmatpush1.bf16.xpose.msra.mxu0 %v54
  %78 = vmatprep.subr.bf16.mxu0 0
  %79 = vmatpush1.bf16.xpose.msra.mxu0 %v51
  %80 = vmatprep.subr.bf16.mxu0 0
  %81 = vmatpush1.bf16.xpose.msra.mxu0 %v48
  %82 = vmatprep.subr.bf16.mxu0 0
  %83 = vmatpush1.bf16.xpose.msra.mxu0 %v45
  %84 = vmatprep.subr.bf16.mxu0 0
  %85 = vmatpush2.bf16.xpose.msra.mxu0 0
  %86 = vmatprep.subr.bf16.mxu0 0
  %87 = vmatpush2.bf16.xpose.msra.mxu0 0
  %88 = vmatprep.subr.bf16.mxu0 0
  %89 = vmatpush2.bf16.xpose.msra.mxu0 0
  %90 = vmatprep.subr.bf16.mxu0 0
  %91 = vmatpush2.bf16.xpose.msra.mxu0 0
  %92 = vmatprep.subr.bf16.mxu0 0
  %93 = vmatpush2.bf16.xpose.msra.mxu0 0
  %94 = vmatprep.subr.bf16.mxu0 0
  %95 = vmatpush2.bf16.xpose.msra.mxu0 0
  %96 = vmatprep.subr.bf16.mxu0 0
  %97 = vmatpush2.bf16.xpose.msra.mxu0 0
  %98 = vmatprep.subr.bf16.mxu0 0
  %99 = vmatpush2.bf16.xpose.msra.mxu0 0
  %100 = vmatprep.mubr.bf16.mxu0 0
  %101 = vmatmul.mubr.bf16.gmra.mxu0 %v42
  %v102 = vpop.f32.mrf.mxu0
  %v103 = vadd.f32 0.0, %v102
  %v104 = vpop.f32.mrf.mxu0
  %v105 = vpop.f32.mrf.mxu0
  %v106 = vpop.f32.mrf.mxu0
  %107 = vdwg.mxu0
  %v108 = vrot.slane %v103, 4
  %v109 = vmax.f32 %v103, %v108
  %v110 = vrot.slane %v109, 2
  %v111 = vmax.f32 %v109, %v110
  %v112 = vrot.slane %v111, 1
  %v113 = vmax.f32 %v111, %v112
  %v114 = vsub.f32 %v103, %v113
  %v115 = vmul.f32 %v114, 1.442695
  %v116 = vpow.pop %v115
  %v117 = vrot.slane %v116, 4
  %v118 = vadd.f32 %v116, %v117
  %v119 = vrot.slane %v118, 2
  %v120 = vadd.f32 %v118, %v119
  %v121 = vrot.slane %v120, 1
  %v122 = vadd.f32 %v120, %v121
  %v123 = vlaneseq
  %v124 = vshrl.u32 %v123, 7
  %v125 = vld [vmem:[%s2] sm:$0x1]
  %v126 = vlaneseq
  %v127 = vshrl.u32 %v126, 7
  %v128 = vsub.s32 0, %v127
  %v129 = vrot.slane %v125, %v128
  %vm130 = vcmp.eq.s32.totalorder %v124, %v129
  %v131 = vsel %vm130, %v114, 0.0
  %v132 = vrot.slane %v131, 4
  %v133 = vadd.f32 %v131, %v132
  %v134 = vrot.slane %v133, 2
  %v135 = vadd.f32 %v133, %v134
  %v136 = vrot.slane %v135, 1
  %v137 = vadd.f32 %v135, %v136
  %s138 = smul.u32 0, 128
  %v139 = vlaneseq
  %v140 = vand.u32 %v139, 127
  %v141 = vstv %s138
  %v142 = vadd.s32 %v141, %v140
  %vm143 = vcmp.lt.s32.totalorder %v142, 8
  %v144 = vlog2.pop %v122
  %v145 = vmul.f32 %v144, 0.6931472
  %v146 = vsub.f32 %v137, %v145
  %v147 = vsel %vm143, %v146, 0.0
  %148 = vst [vmem:[%s3] sm:$0x1] %v147
  // Predicated region
  $region14: #{pcl_cld_loss_2.2} parent=0 // pred_check
    _
  $region15: #{pcl_cld_loss_2.2} parent=0 // pred_check_branch
    %150 = sbr.rel (0) target = $region17
  $region16: #{pcl_cld_loss_2.2} parent=0 // pred_region
    _
  $region17: #{pcl_cld_loss_2.2} parent=0 // pred_fallthru
    _
  // Predicated region
  $region18: #{pcl_cld_loss_2.2} parent=0 // pred_check
    _
  $region19: #{pcl_cld_loss_2.2} parent=0 // pred_check_branch
    %152 = sbr.rel (0) target = $region21
  $region20: #{pcl_cld_loss_2.2} parent=0 // pred_region
    _
  $region21: #{pcl_cld_loss_2.2} parent=0 // pred_fallthru
    _

</llo_original>
